<compile_context>
chip_gen: v7x
topology: tpu7x:2x2x1
jax: 0.10.0
libtpu: 0.0.40
codegen_flags: <defaults>
</compile_context>

<pallas_src>
import functools

import jax
import jax.numpy as jnp
from jax import lax
from jax.experimental import pallas as pl
from jax.experimental.pallas import tpu as pltpu

EPS = 1e-5
_LANE = 128


# ----------------------------------------------------------------------------
# small helpers
# ----------------------------------------------------------------------------
def _ceil_to(v, m):
    return -(-v // m) * m


def _sublane(dtype):
    return {2: 16, 1: 32}.get(jnp.dtype(dtype).itemsize, 8)


def _padded_bytes(shape, dtype):
    dims = list(shape)
    itemsize = jnp.dtype(dtype).itemsize
    dims[-1] = _ceil_to(dims[-1], _LANE)
    if len(dims) >= 2:
        dims[-2] = _ceil_to(dims[-2], _sublane(dtype))
    n = 1
    for d in dims:
        n *= d
    return n * itemsize


def _vmem_estimate(entries):
    """entries: iterable of (shape, dtype, buffer_count)."""
    return sum(_padded_bytes(s, d) * c for s, d, c in entries)


def _tpu_vmem_bytes():
    try:
        info = pltpu.get_tpu_info()
        v = getattr(info, "vmem_capacity_bytes", None)
        if v:
            return int(v)
    except Exception:
        pass
    return 128 * 1024 * 1024


def _working_set_budget():
    # ~1/6 of physical VMEM: ~21 MiB on 128 MiB parts (v5e/v6e), ~10.5 MiB on
    # 64 MiB parts (v7x); leaves room for double-buffering + compiler scratch.
    return int(min(24 * 1024 * 1024, max(6 * 1024 * 1024, _tpu_vmem_bytes() // 6)))


def _vmem_limit(est_bytes):
    cap = int(0.9 * _tpu_vmem_bytes())
    return int(min(cap, max(2 * est_bytes, 24 * 1024 * 1024)))


def _pick_stats_row_tile(n, c, budget):
    """Largest row tile dividing n, multiple of 8, that fits the budget
    (double-buffered input).  Prefers >= 2 tiles (megacore)."""
    max_rows = max(8, budget // max(1, 2 * _ceil_to(c, _LANE) * 4))
    cap = min(n // 2 if n >= 16 else n, max_rows)
    best = None
    for d in range(8, cap + 1, 8):
        if n % d == 0:
            best = d
    return best if best is not None else n


def _pick_conv_row_tile(h_out, s, fits):
    """Largest output-row tile dividing h_out, multiple of s, that satisfies
    `fits` (device-aware VMEM budget).  Capped at h_out//2 so the row axis can
    still be megacore-sharded when B == 1.  Falls back to the smallest tile."""
    cap = h_out // 2 if h_out >= 2 * s else h_out
    best = None
    for t in range(s, cap + 1, s):
        if h_out % t == 0 and fits(t):
            best = t
    return best if best is not None else s


def _pad_last(a, target):
    pad = target - a.shape[-1]
    if pad == 0:
        return a
    return jnp.pad(a, [(0, 0)] * (a.ndim - 1) + [(0, pad)])


def _pack_conv_w(w, ci_p, co_p):
    """(3,3,Ci,Co) -> zero-padded (9*Ci_p, Co_p) bf16 for the im2col matmul."""
    kh, kw, ci, co = w.shape
    w = jnp.pad(w, ((0, 0), (0, 0), (0, ci_p - ci), (0, co_p - co)))
    return w.reshape(kh * kw * ci_p, co_p).astype(jnp.bfloat16)


def _ups_rows(v, s):
    if s == 1:
        return v
    r, w, c = v.shape
    return jnp.broadcast_to(v[:, None, :, :], (r, s, w, c)).reshape(r * s, w, c)


def _ups_cols(v, s):
    if s == 1:
        return v
    r, w, c = v.shape
    return jnp.broadcast_to(v[:, :, None, :], (r, w, s, c)).reshape(r, w * s, c)


def _colsum(v):
    """Per-channel sum of a 2-D (rows, C) array -> (1, C).  Folds rows into
    sublane groups so most adds are VPU vreg adds; one XLU reduce at the end."""
    r, c = v.shape
    if r > 8 and r % 8 == 0:
        v = jnp.sum(v.reshape(r // 8, 8, c), axis=0)
    return jnp.sum(v, axis=0, keepdims=True)


# ----------------------------------------------------------------------------
# Kernel 1: per-channel batch statistics (per-tile partials, parallel grid)
# ----------------------------------------------------------------------------
def _stats_partial_kernel(x_ref, part_ref):
    xv = x_ref[...].astype(jnp.float32)
    part_ref[0, 0:1, :] = _colsum(xv)
    part_ref[0, 1:2, :] = _colsum(xv * xv)


def batch_stats(x_nhwc):
    """Per-channel (mean, inv_std) over (N, H, W), biased variance."""
    B, H, W, C = x_nhwc.shape
    n = B * H * W
    flat = x_nhwc.reshape(n, C)
    budget = _working_set_budget()
    tr = _pick_stats_row_tile(n, C, budget)
    nt = n // tr
    est = _vmem_estimate([((tr, C), jnp.float32, 2),
                          ((2, C), jnp.float32, 2)])
    part = pl.pallas_call(
        _stats_partial_kernel,
        out_shape=jax.ShapeDtypeStruct((nt, 2, C), jnp.float32),
        grid=(nt,),
        in_specs=[pl.BlockSpec((tr, C), lambda i: (i, 0))],
        out_specs=pl.BlockSpec((1, 2, C), lambda i: (i, 0, 0)),
        compiler_params=pltpu.CompilerParams(
            dimension_semantics=("parallel",),
            vmem_limit_bytes=_vmem_limit(est)),
    )(flat)
    s = jnp.sum(part[:, 0, :], axis=0)
    q = jnp.sum(part[:, 1, :], axis=0)
    mean = s / n
    var = jnp.maximum(q / n - mean * mean, 0.0)
    return mean.reshape(1, C), lax.rsqrt(var + EPS).reshape(1, C)


# ----------------------------------------------------------------------------
# Shared fused body: CBN + ReLU -> nearest-upsample(s) -> pad(1) -> im2col
#                    -> ONE MXU matmul with K = 9 * C
# ----------------------------------------------------------------------------
def _conv3x3_im2col(i, nb, xm, xt, xb, a, c, w_ref, tile_ref, col_ref, s):
    """xm: (TRs, W, C) raw rows; xt/xb: (1, W, C) halo rows (row above / below
    the tile; zeroed at the image borders).  CBN + ReLU in f32 (VPU), nearest
    upsample by s, zero-pad by 1, single bf16 cast at the tile write, then the
    9 shifted windows are copied into a lane-aligned (TR, Ws, 9*C) bf16 buffer
    and contracted in one MXU matmul against w_ref (9*C, Cout).
    Returns (TR*Ws, Cout) f32."""
    TRs, W, Cin = xm.shape
    TR, Ws = TRs * s, W * s

    def norm_relu(v):
        return jnp.maximum(v * a + c, 0.0)

    main = norm_relu(xm)
    top = norm_relu(xt) * (i > 0).astype(jnp.float32)        # zero at top edge
    bot = norm_relu(xb) * (i < nb - 1).astype(jnp.float32)   # zero at bottom

    main = _ups_cols(_ups_rows(main, s), s)                  # (TR, Ws, Cin)
    top = _ups_cols(top, s)                                  # (1, Ws, Cin)
    bot = _ups_cols(bot, s)

    zero_col = jnp.zeros((TR + 2, 1, Cin), jnp.bfloat16)
    tile_ref[:, 0:1, :] = zero_col
    tile_ref[:, Ws + 1:Ws + 2, :] = zero_col
    tile_ref[0:1, 1:Ws + 1, :] = top.astype(jnp.bfloat16)
    tile_ref[TR + 1:TR + 2, 1:Ws + 1, :] = bot.astype(jnp.bfloat16)
    tile_ref[1:TR + 1, 1:Ws + 1, :] = main.astype(jnp.bfloat16)

    # im2col: channel offsets t*Cin are multiples of 128 (channels padded),
    # so these are plain unmasked lane-aligned VMEM copies.
    for kh in range(3):
        for kw in range(3):
            t = kh * 3 + kw
            col_ref[:, :, t * Cin:(t + 1) * Cin] = \
                tile_ref[kh:kh + TR, kw:kw + Ws, :]

    patches = col_ref[...].reshape(TR * Ws, 9 * Cin)
    return jnp.dot(patches, w_ref[...], preferred_element_type=jnp.float32)


# ----------------------------------------------------------------------------
# Kernel A: CBN1 + ReLU + upsample + 3x3 conv1  (+ fused partial stats of h)
# ----------------------------------------------------------------------------
def _cbn_ups_conv_kernel(xm_ref, xt_ref, xb_ref, mean_ref, istd_ref, sc_ref,
                         sh_ref, w_ref, b_ref, o_ref, ps_ref, pq_ref,
                         tile_ref, col_ref, *, s):
    i = pl.program_id(1)
    nb = pl.num_programs(1)
    a = istd_ref[0] * sc_ref[0, 0]
    c = sh_ref[0, 0] - mean_ref[0] * a
    acc = _conv3x3_im2col(i, nb, xm_ref[0], xt_ref[0], xb_ref[0],
                          a, c, w_ref, tile_ref, col_ref, s)
    _, TR, Ws, Cout = o_ref.shape
    out = acc + b_ref[0]                                     # (TR*Ws, Cout) f32
    # Fused batch statistics of h: per-tile partials only (grid stays parallel,
    # no cross-iteration accumulators); finished with a tiny XLA reduction.
    ps_ref[...] = _colsum(out).reshape(1, 1, 1, Cout)
    pq_ref[...] = _colsum(out * out).reshape(1, 1, 1, Cout)
    o_ref[...] = out.reshape(1, TR, Ws, Cout).astype(o_ref.dtype)


def cbn_relu_ups_conv3x3(x, mean, istd, scale, shift, w, bias, s):
    B, H, W, Cin = x.shape
    Cout = w.shape[-1]
    Hs, Ws = H * s, W * s
    budget = _working_set_budget()

    def est(TR):
        TRs = TR // s
        return _vmem_estimate([
            ((TRs, W, Cin), jnp.float32, 2),
            ((1, W, Cin), jnp.float32, 4),
            ((1, Cin), jnp.float32, 8),
            ((9 * Cin, Cout), jnp.bfloat16, 2),
            ((1, Cout), jnp.float32, 2),
            ((TR, Ws, Cout), jnp.float32, 2),
            ((1, 1, Cout), jnp.float32, 4),
            ((TR + 2, Ws + 2, Cin), jnp.bfloat16, 1),
            ((TR, Ws, 9 * Cin), jnp.bfloat16, 1),
        ])

    TR = _pick_conv_row_tile(Hs, s, lambda t: est(t) <= budget)
    TRs = TR // s
    nrt = Hs // TR

    return pl.pallas_call(
        functools.partial(_cbn_ups_conv_kernel, s=s),
        out_shape=(jax.ShapeDtypeStruct((B, Hs, Ws, Cout), jnp.float32),
                   jax.ShapeDtypeStruct((B, nrt, 1, Cout), jnp.float32),
                   jax.ShapeDtypeStruct((B, nrt, 1, Cout), jnp.float32)),
        grid=(B, nrt),
        in_specs=[
            pl.BlockSpec((1, TRs, W, Cin), lambda b, i: (b, i, 0, 0)),
            pl.BlockSpec((1, 1, W, Cin),
                         lambda b, i: (b, jnp.maximum(i * TRs - 1, 0), 0, 0)),
            pl.BlockSpec((1, 1, W, Cin),
                         lambda b, i: (b, jnp.minimum((i + 1) * TRs, H - 1), 0, 0)),
            pl.BlockSpec((1, Cin), lambda b, i: (0, 0)),
            pl.BlockSpec((1, Cin), lambda b, i: (0, 0)),
            pl.BlockSpec((1, 1, Cin), lambda b, i: (b, 0, 0)),
            pl.BlockSpec((1, 1, Cin), lambda b, i: (b, 0, 0)),
            pl.BlockSpec((9 * Cin, Cout), lambda b, i: (0, 0)),
            pl.BlockSpec((1, Cout), lambda b, i: (0, 0)),
        ],
        out_specs=(pl.BlockSpec((1, TR, Ws, Cout), lambda b, i: (b, i, 0, 0)),
                   pl.BlockSpec((1, 1, 1, Cout), lambda b, i: (b, i, 0, 0)),
                   pl.BlockSpec((1, 1, 1, Cout), lambda b, i: (b, i, 0, 0))),
        scratch_shapes=[pltpu.VMEM((TR + 2, Ws + 2, Cin), jnp.bfloat16),
                        pltpu.VMEM((TR, Ws, 9 * Cin), jnp.bfloat16)],
        compiler_params=pltpu.CompilerParams(
            dimension_semantics=("parallel", "parallel"),
            vmem_limit_bytes=_vmem_limit(est(TR))),
    )(x, x, x, mean, istd, scale, shift, w, bias)


# ----------------------------------------------------------------------------
# Kernel B: CBN2 + ReLU + 3x3 conv2 + fused residual bypass
# ----------------------------------------------------------------------------
def _cbn_conv_res_kernel(hm_ref, ht_ref, hb_ref, mean_ref, istd_ref, sc_ref,
                         sh_ref, w_ref, b_ref, xb_ref, o_ref,
                         tile_ref, col_ref, *, s):
    i = pl.program_id(1)
    nb = pl.num_programs(1)
    a = istd_ref[0] * sc_ref[0, 0]
    c = sh_ref[0, 0] - mean_ref[0] * a
    acc = _conv3x3_im2col(i, nb, hm_ref[0], ht_ref[0], hb_ref[0],
                          a, c, w_ref, tile_ref, col_ref, 1)
    _, TR, Ws, Cout = o_ref.shape
    byp = _ups_cols(_ups_rows(xb_ref[0], s), s)              # identity bypass
    out = acc + b_ref[0] + byp.reshape(TR * Ws, Cout)
    o_ref[...] = out.reshape(1, TR, Ws, Cout).astype(o_ref.dtype)


def _cbn_conv_proj_res_kernel(hm_ref, ht_ref, hb_ref, mean_ref, istd_ref,
                              sc_ref, sh_ref, w_ref, b_ref, xb_ref, wb_ref,
                              bb_ref, o_ref, tile_ref, col_ref, *, s):
    i = pl.program_id(1)
    nb = pl.num_programs(1)
    a = istd_ref[0] * sc_ref[0, 0]
    c = sh_ref[0, 0] - mean_ref[0] * a
    acc = _conv3x3_im2col(i, nb, hm_ref[0], ht_ref[0], hb_ref[0],
                          a, c, w_ref, tile_ref, col_ref, 1)
    _, TR, Ws, Cout = o_ref.shape
    byp = _ups_cols(_ups_rows(xb_ref[0], s), s)
    Cin = byp.shape[-1]
    byp = byp.reshape(TR * Ws, Cin).astype(jnp.bfloat16)
    out = (acc + b_ref[0] + bb_ref[0]
           + jnp.dot(byp, wb_ref[...], preferred_element_type=jnp.float32))
    o_ref[...] = out.reshape(1, TR, Ws, Cout).astype(o_ref.dtype)


def cbn_relu_conv3x3_add_bypass(h, mean, istd, scale, shift, w, bias,
                                x_src, s, wb=None, bb=None):
    B, Hs, Ws, Cm = h.shape
    Cout = w.shape[-1]
    _, H, W, Cin = x_src.shape
    if wb is None:
        assert Cin == Cout, "identity bypass needs matching channel counts"
    budget = _working_set_budget()

    def est(TR):
        TRs = TR // s
        e = [
            ((TR, Ws, Cm), jnp.float32, 2),
            ((1, Ws, Cm), jnp.float32, 4),
            ((1, Cm), jnp.float32, 8),
            ((9 * Cm, Cout), jnp.bfloat16, 2),
            ((1, Cout), jnp.float32, 2),
            ((TRs, W, Cin), jnp.float32, 2),
            ((TR, Ws, Cout), jnp.float32, 2),
            ((TR + 2, Ws + 2, Cm), jnp.bfloat16, 1),
            ((TR, Ws, 9 * Cm), jnp.bfloat16, 1),
        ]
        if wb is not None:
            e.append(((Cin, Cout), jnp.bfloat16, 2))
        return _vmem_estimate(e)

    TR = _pick_conv_row_tile(Hs, s, lambda t: est(t) <= budget)
    TRs = TR // s
    nrt = Hs // TR

    in_specs = [
        pl.BlockSpec((1, TR, Ws, Cm), lambda b, i: (b, i, 0, 0)),
        pl.BlockSpec((1, 1, Ws, Cm),
                     lambda b, i: (b, jnp.maximum(i * TR - 1, 0), 0, 0)),
        pl.BlockSpec((1, 1, Ws, Cm),
                     lambda b, i: (b, jnp.minimum((i + 1) * TR, Hs - 1), 0, 0)),
        pl.BlockSpec((1, Cm), lambda b, i: (0, 0)),
        pl.BlockSpec((1, Cm), lambda b, i: (0, 0)),
        pl.BlockSpec((1, 1, Cm), lambda b, i: (b, 0, 0)),
        pl.BlockSpec((1, 1, Cm), lambda b, i: (b, 0, 0)),
        pl.BlockSpec((9 * Cm, Cout), lambda b, i: (0, 0)),
        pl.BlockSpec((1, Cout), lambda b, i: (0, 0)),
        pl.BlockSpec((1, TRs, W, Cin), lambda b, i: (b, i, 0, 0)),
    ]
    args = [h, h, h, mean, istd, scale, shift, w, bias, x_src]
    if wb is not None:
        kernel = functools.partial(_cbn_conv_proj_res_kernel, s=s)
        in_specs += [pl.BlockSpec((Cin, Cout), lambda b, i: (0, 0)),
                     pl.BlockSpec((1, Cout), lambda b, i: (0, 0))]
        args += [wb, bb]
    else:
        kernel = functools.partial(_cbn_conv_res_kernel, s=s)

    return pl.pallas_call(
        kernel,
        out_shape=jax.ShapeDtypeStruct((B, Hs, Ws, Cout), jnp.float32),
        grid=(B, nrt),
        in_specs=in_specs,
        out_specs=pl.BlockSpec((1, TR, Ws, Cout), lambda b, i: (b, i, 0, 0)),
        scratch_shapes=[pltpu.VMEM((TR + 2, Ws + 2, Cm), jnp.bfloat16),
                        pltpu.VMEM((TR, Ws, 9 * Cm), jnp.bfloat16)],
        compiler_params=pltpu.CompilerParams(
            dimension_semantics=("parallel", "parallel"),
            vmem_limit_bytes=_vmem_limit(est(TR))),
    )(*args)


# ----------------------------------------------------------------------------
# Parameters / public forward
# ----------------------------------------------------------------------------
def xavier_uniform(key, shape, fan_in, fan_out, gain=1.0):
    bound = gain * (6.0 / (fan_in + fan_out)) ** 0.5
    return jax.random.uniform(key, shape, jnp.float32, -bound, bound)


def init_params(key, in_channels, out_channels, y_dim, stride):
    ks = jax.random.split(key, 8)
    p = {}
    p["conv1_w"] = xavier_uniform(ks[0], (3, 3, in_channels, out_channels),
                                  in_channels * 9, out_channels * 9, 1.0)
    p["conv1_b"] = jax.random.uniform(ks[1], (out_channels,), jnp.float32,
                                      -1.0 / (in_channels * 9) ** 0.5,
                                      1.0 / (in_channels * 9) ** 0.5)
    p["conv2_w"] = xavier_uniform(ks[2], (3, 3, out_channels, out_channels),
                                  out_channels * 9, out_channels * 9, 1.0)
    p["conv2_b"] = jax.random.uniform(ks[3], (out_channels,), jnp.float32,
                                      -1.0 / (out_channels * 9) ** 0.5,
                                      1.0 / (out_channels * 9) ** 0.5)
    # CBN embeddings: scale xavier(gain=1), shift xavier(gain=0) == zeros
    p["bn1_scale"] = xavier_uniform(ks[4], (y_dim, in_channels), in_channels, y_dim, 1.0)
    p["bn1_shift"] = jnp.zeros((y_dim, in_channels), jnp.float32)
    p["bn2_scale"] = xavier_uniform(ks[5], (y_dim, out_channels), out_channels, y_dim, 1.0)
    p["bn2_shift"] = jnp.zeros((y_dim, out_channels), jnp.float32)
    if stride != 1 and in_channels != out_channels:
        b = 1.0 / in_channels ** 0.5
        p["bypass_w"] = jax.random.uniform(ks[6], (in_channels, out_channels),
                                           jnp.float32, -b, b)
        p["bypass_b"] = jax.random.uniform(ks[7], (out_channels,), jnp.float32, -b, b)
    return p


def res_block_generator_forward(params, inp_nchw, y, stride, lane_pad=_LANE):
    """Pallas forward. inp_nchw: (B, Cin, H, W) f32, y: (B,) int32 labels.
    Channels are zero-padded to a multiple of `lane_pad` (exact: padded lanes
    stay identically zero) and sliced off before returning."""
    x = jnp.transpose(inp_nchw, (0, 2, 3, 1)).astype(jnp.float32)  # NHWC
    B, H, W, Cin = x.shape
    Cout = params["conv1_w"].shape[-1]
    s = stride
    Cin_p = _ceil_to(Cin, lane_pad)
    Cout_p = _ceil_to(Cout, lane_pad)

    x_p = _pad_last(x, Cin_p)

    sc1 = _pad_last(params["bn1_scale"][y], Cin_p).reshape(B, 1, Cin_p)
    sh1 = _pad_last(params["bn1_shift"][y], Cin_p).reshape(B, 1, Cin_p)
    sc2 = _pad_last(params["bn2_scale"][y], Cout_p).reshape(B, 1, Cout_p)
    sh2 = _pad_last(params["bn2_shift"][y], Cout_p).reshape(B, 1, Cout_p)

    w1 = _pack_conv_w(params["conv1_w"], Cin_p, Cout_p)     # (9*Cin_p, Cout_p)
    b1 = _pad_last(params["conv1_b"], Cout_p).reshape(1, Cout_p)
    w2 = _pack_conv_w(params["conv2_w"], Cout_p, Cout_p)
    b2 = _pad_last(params["conv2_b"], Cout_p).reshape(1, Cout_p)
    wb = bb = None
    if "bypass_w" in params:
        wb = jnp.pad(params["bypass_w"],
                     ((0, Cin_p - Cin), (0, Cout_p - Cout))).astype(jnp.bfloat16)
        bb = _pad_last(params["bypass_b"], Cout_p).reshape(1, Cout_p)

    mean1, istd1 = batch_stats(x_p)
    h, ps, pq = cbn_relu_ups_conv3x3(x_p, mean1, istd1, sc1, sh1, w1, b1, s)

    # Finish the fused batch statistics of h (tiny XLA reduction; no HBM re-read).
    n2 = float(B * H * s * W * s)
    m2 = jnp.sum(ps, axis=(0, 1, 2)) / n2
    q2 = jnp.sum(pq, axis=(0, 1, 2)) / n2
    var2 = jnp.maximum(q2 - m2 * m2, 0.0)
    mean2 = m2.reshape(1, Cout_p)
    istd2 = lax.rsqrt(var2 + EPS).reshape(1, Cout_p)

    out = cbn_relu_conv3x3_add_bypass(h, mean2, istd2, sc2, sh2, w2, b2,
                                      x_p, s, wb, bb)
    return jnp.transpose(out[..., :Cout], (0, 3, 1, 2))  # back to NCHW


# ----------------------------------------------------------------------------
# Pure-JAX reference (mirrors the kernel's bf16 matmul operands, f32 accum)
# ----------------------------------------------------------------------------
def upsample_nearest(x_nhwc, s):
    if s == 1:
        return x_nhwc
    x = jnp.repeat(x_nhwc, s, axis=1)
    return jnp.repeat(x, s, axis=2)


def ref_forward(params, inp_nchw, y, stride):
    x = jnp.transpose(inp_nchw, (0, 2, 3, 1)).astype(jnp.float32)

    def cbn_relu(v, sc_w, sh_w):
        mean = jnp.mean(v, axis=(0, 1, 2), keepdims=True)
        var = jnp.mean((v - mean) ** 2, axis=(0, 1, 2), keepdims=True)
        a = sc_w[y][:, None, None, :] / jnp.sqrt(var + EPS)
        c = sh_w[y][:, None, None, :] - mean * a
        return jax.nn.relu(v * a + c)

    def conv3(v, w, b):
        return lax.conv_general_dilated(
            v.astype(jnp.bfloat16), w.astype(jnp.bfloat16), (1, 1),
            ((1, 1), (1, 1)), dimension_numbers=("NHWC", "HWIO", "NHWC"),
            preferred_element_type=jnp.float32) + b

    h = cbn_relu(x, params["bn1_scale"], params["bn1_shift"])
    h = upsample_nearest(h, stride)
    h = conv3(h, params["conv1_w"], params["conv1_b"])
    h = cbn_relu(h, params["bn2_scale"], params["bn2_shift"])
    h = conv3(h, params["conv2_w"], params["conv2_b"])

    byp = upsample_nearest(x, stride) if stride != 1 else x
    if "bypass_w" in params:
        cin, cout = params["bypass_w"].shape
        byp = lax.conv_general_dilated(
            byp.astype(jnp.bfloat16),
            params["bypass_w"].reshape(1, 1, cin, cout).astype(jnp.bfloat16),
            (1, 1), ((0, 0), (0, 0)),
            dimension_numbers=("NHWC", "HWIO", "NHWC"),
            preferred_element_type=jnp.float32) + params["bypass_b"]
    return jnp.transpose(h + byp, (0, 3, 1, 2))


if __name__ == "__main__":
    key = jax.random.PRNGKey(0)
    k_inp, k_y, k_p1, k_p2 = jax.random.split(key, 4)

    B, H, W, y_dim = 2, 16, 16, 5
    y = jax.random.randint(k_y, (B,), 0, y_dim)

    configs = [
        # (in_channels, out_channels, stride)
        (4, 8, 2),   # upsample + 1x1-conv bypass (fused into conv2 kernel)
        (4, 4, 1),   # identity bypass
    ]
    for cfg_idx, (cin, cout, stride) in enumerate(configs):
        pkey = k_p1 if cfg_idx == 0 else k_p2
        params = init_params(pkey, cin, cout, y_dim, stride)
        inp = jax.random.normal(k_inp, (B, cin, H, W), jnp.float32)

        out = res_block_generator_forward(params, inp, y, stride)
        out = jax.block_until_ready(out)

        ref = ref_forward(params, inp, y, stride)
        assert out.shape == (B, cout, H * stride, W * stride), out.shape
        max_err = float(jnp.max(jnp.abs(out - ref)))
        assert jnp.allclose(out, ref, rtol=1e-2, atol=1e-2), max_err

    print("KERNEL_OK")
</pallas_src>

<mosaic_0001>
module attributes {stable_mosaic.version = 11 : i64} {
  func.func @_stats_partial_kernel(%arg0: i32, %arg1: memref<256x128xf32, #tpu.memory_space<vmem>>, %arg2: memref<1x2x128xf32, #tpu.memory_space<vmem>>) attributes {dimension_semantics = [#tpu.dimension_semantics<parallel>], iteration_bounds = array<i64: 2>, scalar_prefetch = 0 : i64, scratch_operands = 0 : i64, tpu.core_type = #tpu.core_type<tc>, window_params = [{transform_indices = @transform_0, window_bounds = array<i64: 256, 128>}, {transform_indices = @transform_1, window_bounds = array<i64: 1, 2, 128>}]} {
    %c0 = arith.constant 0 : index
    %c0_0 = arith.constant 0 : index
    %0 = vector.load %arg1[%c0, %c0_0] : memref<256x128xf32, #tpu.memory_space<vmem>>, vector<256x128xf32>
    %1 = vector.shape_cast %0 : vector<256x128xf32> to vector<32x8x128xf32>
    %cst = arith.constant dense<0.000000e+00> : vector<8x128xf32>
    %2 = vector.multi_reduction <add>, %1, %cst [0] : vector<32x8x128xf32> to vector<8x128xf32>
    %cst_1 = arith.constant dense<0.000000e+00> : vector<128xf32>
    %3 = vector.multi_reduction <add>, %2, %cst_1 [0] : vector<8x128xf32> to vector<128xf32>
    %4 = vector.shape_cast %3 : vector<128xf32> to vector<1x128xf32>
    %c0_2 = arith.constant 0 : index
    %c0_3 = arith.constant 0 : index
    %c0_4 = arith.constant 0 : index
    %5 = vector.load %arg2[%c0_2, %c0_3, %c0_4] : memref<1x2x128xf32, #tpu.memory_space<vmem>>, vector<1x1x128xf32>
    %6 = vector.shape_cast %5 : vector<1x1x128xf32> to vector<1x128xf32>
    %7 = vector.shape_cast %4 : vector<1x128xf32> to vector<1x1x128xf32>
    tpu.vector_store %arg2[%c0_2, %c0_3, %c0_4], %7 {strides = array<i32>} : memref<1x2x128xf32, #tpu.memory_space<vmem>>, vector<1x1x128xf32>,
    %8 = arith.mulf %0, %0 : vector<256x128xf32>
    %9 = vector.shape_cast %8 : vector<256x128xf32> to vector<32x8x128xf32>
    %cst_5 = arith.constant dense<0.000000e+00> : vector<8x128xf32>
    %10 = vector.multi_reduction <add>, %9, %cst_5 [0] : vector<32x8x128xf32> to vector<8x128xf32>
    %cst_6 = arith.constant dense<0.000000e+00> : vector<128xf32>
    %11 = vector.multi_reduction <add>, %10, %cst_6 [0] : vector<8x128xf32> to vector<128xf32>
    %12 = vector.shape_cast %11 : vector<128xf32> to vector<1x128xf32>
    %c0_7 = arith.constant 0 : index
    %c1 = arith.constant 1 : index
    %c0_8 = arith.constant 0 : index
    %13 = vector.load %arg2[%c0_7, %c1, %c0_8] : memref<1x2x128xf32, #tpu.memory_space<vmem>>, vector<1x1x128xf32>
    %14 = vector.shape_cast %13 : vector<1x1x128xf32> to vector<1x128xf32>
    %15 = vector.shape_cast %12 : vector<1x128xf32> to vector<1x1x128xf32>
    tpu.vector_store %arg2[%c0_7, %c1, %c0_8], %15 {strides = array<i32>} : memref<1x2x128xf32, #tpu.memory_space<vmem>>, vector<1x1x128xf32>,
    return
  }
  func.func @transform_0(%arg0: i32) -> (i32, i32) {
    %c0_i32 = arith.constant 0 : i32
    %c0_i32_0 = arith.constant 0 : i32
    return %arg0, %c0_i32 : i32, i32
  }
  func.func @transform_1(%arg0: i32) -> (i32, i32, i32) {
    %c0_i32 = arith.constant 0 : i32
    %c0_i32_0 = arith.constant 0 : i32
    %c0_i32_1 = arith.constant 0 : i32
    return %arg0, %c0_i32, %c0_i32_0 : i32, i32, i32
  }
}

</mosaic_0001>

<llo_original>
// kernel: tpu_custom_call.1
$region0: #{tpu_custom_call.1}
  #allocation0 [shape = 'u32[]', space=smem, size = 0x4, offset = 0x4, fixed_abs, tag = 'smem constant byte address 0x4 - core index']
  #allocation1 [shape = 'u32[144,128]{1,0:T(1,128)}', space=vmem, size = 0x12000, scoped, tag = 'internal scratch']
  %s0 = inlined_call_operand.hbm [shape: f32[512,128], index: 0, kind: input, shape index: {}]
  %s1 = inlined_call_operand.hbm [shape: f32[2,2,128], index: 1, kind: output, shape index: {}]
  %s2 = sld [smem:[#allocation0]]
  $region41: #{tpu_custom_call.1} parent=0
    _
  %s4 = ssub.s32 1, %s2
  %s5 = scalar_select 0, %s4, %s2
  $region1: #{tpu_custom_call.1} parent=0
    #allocation2 [shape = 'u8[262144]{0}', space=vmem, size = 0x40000, scoped, tag = 'input window, operand 0']
    #allocation3 [shape = 's32[2]{0}', space=sflag, size = 0x8, scoped, tag = 'scoped memory for tpu_custom_call.1']
    #allocation4 [shape = 's32[2]{0}', space=sflag, size = 0x8, scoped, tag = 'scoped memory for tpu_custom_call.1']
    #allocation5 [shape = 'u8[2048]{0}', space=vmem, size = 0x800, scoped, tag = 'output window, operand 0']
    %6 = vsyncpa [#allocation3], 0
    %s7 = scalar_lea.sflag [#allocation3], 1
    %8 = vsyncpa %s7, 0
    %9 = vsyncpa [#allocation4], 0
    %s10 = scalar_lea.sflag [#allocation4], 1
    %11 = vsyncpa %s10, 0
    loop: start=0, step=1, limit=4
    $region2: #{tpu_custom_call.1} parent=1 // loop_pre_header
      _
    $region3: #{tpu_custom_call.1} parent=1 // loop_header
      %s13 = sphi 0, %s17
      %p14 = scmp.ge.s32.totalorder %s13, 4
      %s23 = sphi 0, %s25
      %s26 = sphi 0, %s23
      %s27 = sphi 0, %s26
      %s43 = sphi 0, %s27
      %s49 = sphi 0, %s51
      %s52 = sphi 0, %s49
      %s53 = sphi 0, %s52
      %s69 = sphi 0, %s53
    $region4: #{tpu_custom_call.1} parent=1 // loop_header_branch
      %16 = sbr.rel (%p14) target = $region8
    $region5: #{tpu_custom_call.1} parent=1 // loop_body
      %s18 = ssub.s32 %s13, 1
      %s19 = ssub.s32 %s13, 2
      %s20 = sadd.s32 %s13, 1
      %s21 = ssub.s32 %s13, %s20
      %p22 = scmp.eq.s32.totalorder %s21, 0
      %s24 = sadd.s32 %s23, 1
      %s25 = scalar_select %p22, %s23, %s24
      %p28 = pneg %p22
      %p29 = scmp.eq.s32.totalorder %s13, 1
      %p30 = por %p28, %p29
      %p31 = scmp.ne.s32.totalorder %s23, %s26
      %p32 = scmp.eq.s32.totalorder %s13, 0
      %p33 = por %p31, %p32
      %p34 = scmp.ne.s32.totalorder %s23, %s26
      %p35 = scmp.eq.s32.totalorder %s18, 1
      %p36 = por %p34, %p35
      %p37 = scmp.ne.s32.totalorder %s26, %s27
      %p38 = scmp.eq.s32.totalorder %s18, 0
      %p39 = por %p37, %p38
      %p40 = scmp.ne.s32.totalorder %s26, %s27
      %p41 = scmp.eq.s32.totalorder %s19, 1
      %p42 = por %p40, %p41
      %p44 = scmp.ne.s32.totalorder %s27, %s43
      %p45 = scmp.eq.s32.totalorder %s19, 0
      %p46 = por %p44, %p45
      %s47 = ssub.s32 %s13, %s20
      %p48 = scmp.eq.s32.totalorder %s47, 0
      %s50 = sadd.s32 %s49, 1
      %s51 = scalar_select %p48, %s49, %s50
      %p54 = pneg %p48
      %p55 = scmp.eq.s32.totalorder %s13, 1
      %p56 = por %p54, %p55
      %p57 = scmp.ne.s32.totalorder %s49, %s52
      %p58 = scmp.eq.s32.totalorder %s13, 0
      %p59 = por %p57, %p58
      %p60 = scmp.ne.s32.totalorder %s49, %s52
      %p61 = scmp.eq.s32.totalorder %s18, 1
      %p62 = por %p60, %p61
      %p63 = scmp.ne.s32.totalorder %s52, %s53
      %p64 = scmp.eq.s32.totalorder %s18, 0
      %p65 = por %p63, %p64
      %p66 = scmp.ne.s32.totalorder %s52, %s53
      %p67 = scmp.eq.s32.totalorder %s19, 1
      %p68 = por %p66, %p67
      %p70 = scmp.ne.s32.totalorder %s53, %s69
      %p71 = scmp.eq.s32.totalorder %s19, 0
      %p72 = por %p70, %p71
      %p73 = scmp.le.s32.totalorder 1, %s13
      %p74 = scmp.lt.s32.totalorder %s13, 3
      %p75 = pnand %p73, %p74
      %p76 = pneg %p75
      // Predicated region
      $region9: #{tpu_custom_call.1} parent=5 // pred_check
        _
      $region10: #{tpu_custom_call.1} parent=5 // pred_check_branch
        %78 = sbr.rel (%p75) target = $region12
      $region11: #{tpu_custom_call.1} parent=5 // pred_region
        %s79 = ssub.s32 %s13, 1
      $region12: #{tpu_custom_call.1} parent=5 // pred_fallthru
        _
      %p80 = scmp.lt.s32.totalorder %s13, 2
      // Predicated region
      $region13: #{tpu_custom_call.1} parent=5 // pred_check
        %p81 = pneg %p80
      $region14: #{tpu_custom_call.1} parent=5 // pred_check_branch
        %83 = sbr.rel (%p81) target = $region16
      $region15: #{tpu_custom_call.1} parent=5 // pred_region
        // Predicated region
        $region17: #{tpu_custom_call.1} parent=15 // pred_check
          %p84 = pneg %p33
        $region18: #{tpu_custom_call.1} parent=15 // pred_check_branch
          %86 = sbr.rel (%p84) target = $region20
        $region19: #{tpu_custom_call.1} parent=15 // pred_region
          %s87 = sand.u32 %s23, 1
          %s88 = scalar_lea.sflag [#allocation3], %s87
          %s89 = sand.u32 %s23, 1
          %s90 = smul.addr %s89, 256
          %s91 = scalar_lea.vmem [#allocation2], %s90
          %s92 = smul.u32 32, %s13
          %s94 = ssub.s32 4096, 4096
          %95 = vsyncadd %s88, %s94
          %s96 = smul.addr %s92, 128
          %s97 = scalar_lea.hbm %s0, %s96
          %s98 = sshll.u32 %s91, 4
          %s99 = int_to_ptr.vmem [resolvable:$true] %s98
          %104 = dma.hbm_to_vmem [thread:$0]  %s97, 4096, %s99, %s88, 128, 128, 8
        $region20: #{tpu_custom_call.1} parent=15 // pred_fallthru
          _
      $region16: #{tpu_custom_call.1} parent=5 // pred_fallthru
        _
      %p105 = scmp.le.s32.totalorder 1, %s13
      %p106 = scmp.lt.s32.totalorder %s13, 3
      %p107 = pnand %p105, %p106
      %p108 = pneg %p107
      // Predicated region
      $region21: #{tpu_custom_call.1} parent=5 // pred_check
        _
      $region22: #{tpu_custom_call.1} parent=5 // pred_check_branch
        %110 = sbr.rel (%p107) target = $region24
      $region23: #{tpu_custom_call.1} parent=5 // pred_region
        %s111 = ssub.s32 %s13, 1
        %s112 = sand.u32 %s26, 1
        %s113 = scalar_lea.sflag [#allocation3], %s112
        %s114 = sand.u32 %s26, 1
        %s115 = smul.addr %s114, 256
        %s116 = scalar_lea.vmem [#allocation2], %s115
        // Predicated region
        $region25: #{tpu_custom_call.1} parent=23 // pred_check
          %p117 = pneg %p39
        $region26: #{tpu_custom_call.1} parent=23 // pred_check_branch
          %119 = sbr.rel (%p117) target = $region28
        $region27: #{tpu_custom_call.1} parent=23 // pred_region
          %120 = dma.done %s113, 4096
        $region28: #{tpu_custom_call.1} parent=23 // pred_fallthru
          _
        %s121 = sand.u32 %s26, 1
        %s122 = scalar_lea.sflag [#allocation3], %s121
        %s123 = sand.u32 %s26, 1
        %s124 = smul.addr %s123, 256
        %s125 = scalar_lea.vmem [#allocation2], %s124
        %p126 = pneg %p39
        %p127 = pneg %p36
        %p128 = pneg %p65
        %p129 = pneg %p62
        %s130 = sand.u32 %s52, 1
        %s131 = scalar_lea.sflag [#allocation4], %s130
        %s132 = sand.u32 %s52, 1
        %s133 = smul.addr %s132, 2
        %s134 = scalar_lea.vmem [#allocation5], %s133
        %s135 = smul.u32 32, %s18
        %v136 = vld [vmem:[%s116] sm:$0xff]
        %v137 = vld [vmem:[%s116 + $0x8] sm:$0xff]
        %v138 = vld [vmem:[%s116 + $0x10] sm:$0xff]
        %v139 = vld [vmem:[%s116 + $0x18] sm:$0xff]
        %v140 = vld [vmem:[%s116 + $0x20] sm:$0xff]
        %v141 = vld [vmem:[%s116 + $0x28] sm:$0xff]
        %v142 = vld [vmem:[%s116 + $0x30] sm:$0xff]
        %v143 = vld [vmem:[%s116 + $0x38] sm:$0xff]
        %v144 = vld [vmem:[%s116 + $0x40] sm:$0xff]
        %v145 = vld [vmem:[%s116 + $0x48] sm:$0xff]
        %v146 = vld [vmem:[%s116 + $0x50] sm:$0xff]
        %v147 = vld [vmem:[%s116 + $0x58] sm:$0xff]
        %v148 = vld [vmem:[%s116 + $0x60] sm:$0xff]
        %v149 = vld [vmem:[%s116 + $0x68] sm:$0xff]
        %v150 = vld [vmem:[%s116 + $0x70] sm:$0xff]
        %v151 = vld [vmem:[%s116 + $0x78] sm:$0xff]
        %v152 = vld [vmem:[%s116 + $0x80] sm:$0xff]
        %v153 = vld [vmem:[%s116 + $0x88] sm:$0xff]
        %v154 = vld [vmem:[%s116 + $0x90] sm:$0xff]
        %v155 = vld [vmem:[%s116 + $0x98] sm:$0xff]
        %v156 = vld [vmem:[%s116 + $0xa0] sm:$0xff]
        %v157 = vld [vmem:[%s116 + $0xa8] sm:$0xff]
        %v158 = vld [vmem:[%s116 + $0xb0] sm:$0xff]
        %v159 = vld [vmem:[%s116 + $0xb8] sm:$0xff]
        %v160 = vld [vmem:[%s116 + $0xc0] sm:$0xff]
        %v161 = vld [vmem:[%s116 + $0xc8] sm:$0xff]
        %v162 = vld [vmem:[%s116 + $0xd0] sm:$0xff]
        %v163 = vld [vmem:[%s116 + $0xd8] sm:$0xff]
        %v164 = vld [vmem:[%s116 + $0xe0] sm:$0xff]
        %v165 = vld [vmem:[%s116 + $0xe8] sm:$0xff]
        %v166 = vld [vmem:[%s116 + $0xf0] sm:$0xff]
        %v167 = vld [vmem:[%s116 + $0xf8] sm:$0xff]
        %v168 = vadd.f32 %v136, %v137
        %v169 = vadd.f32 %v168, %v138
        %v170 = vadd.f32 %v169, %v139
        %v171 = vadd.f32 %v170, %v140
        %v172 = vadd.f32 %v171, %v141
        %v173 = vadd.f32 %v172, %v142
        %v174 = vadd.f32 %v173, %v143
        %v175 = vadd.f32 %v174, %v144
        %v176 = vadd.f32 %v175, %v145
        %v177 = vadd.f32 %v176, %v146
        %v178 = vadd.f32 %v177, %v147
        %v179 = vadd.f32 %v178, %v148
        %v180 = vadd.f32 %v179, %v149
        %v181 = vadd.f32 %v180, %v150
        %v182 = vadd.f32 %v181, %v151
        %v183 = vadd.f32 %v182, %v152
        %v184 = vadd.f32 %v183, %v153
        %v185 = vadd.f32 %v184, %v154
        %v186 = vadd.f32 %v185, %v155
        %v187 = vadd.f32 %v186, %v156
        %v188 = vadd.f32 %v187, %v157
        %v189 = vadd.f32 %v188, %v158
        %v190 = vadd.f32 %v189, %v159
        %v191 = vadd.f32 %v190, %v160
        %v192 = vadd.f32 %v191, %v161
        %v193 = vadd.f32 %v192, %v162
        %v194 = vadd.f32 %v193, %v163
        %v195 = vadd.f32 %v194, %v164
        %v196 = vadd.f32 %v195, %v165
        %v197 = vadd.f32 %v196, %v166
        %v198 = vadd.f32 %v197, %v167
        %v199 = vrot.slane %v198, 4
        %v200 = vadd.f32 %v198, %v199
        %v201 = vrot.slane %v200, 2
        %v202 = vadd.f32 %v200, %v201
        %v203 = vrot.slane %v202, 1
        %v204 = vadd.f32 %v202, %v203
        %205 = vst [vmem:[%s134] sm:$0x1] %v204
        %v206 = vmul.f32 %v136, %v136
        %v207 = vmul.f32 %v137, %v137
        %v208 = vmul.f32 %v138, %v138
        %v209 = vmul.f32 %v139, %v139
        %v210 = vmul.f32 %v140, %v140
        %v211 = vmul.f32 %v141, %v141
        %v212 = vmul.f32 %v142, %v142
        %v213 = vmul.f32 %v143, %v143
        %v214 = vmul.f32 %v144, %v144
        %v215 = vmul.f32 %v145, %v145
        %v216 = vmul.f32 %v146, %v146
        %v217 = vmul.f32 %v147, %v147
        %v218 = vmul.f32 %v148, %v148
        %v219 = vmul.f32 %v149, %v149
        %v220 = vmul.f32 %v150, %v150
        %v221 = vmul.f32 %v151, %v151
        %v222 = vmul.f32 %v152, %v152
        %v223 = vmul.f32 %v153, %v153
        %v224 = vmul.f32 %v154, %v154
        %v225 = vmul.f32 %v155, %v155
        %v226 = vmul.f32 %v156, %v156
        %v227 = vmul.f32 %v157, %v157
        %v228 = vmul.f32 %v158, %v158
        %v229 = vmul.f32 %v159, %v159
        %v230 = vmul.f32 %v160, %v160
        %v231 = vmul.f32 %v161, %v161
        %v232 = vmul.f32 %v162, %v162
        %v233 = vmul.f32 %v163, %v163
        %v234 = vmul.f32 %v164, %v164
        %v235 = vmul.f32 %v165, %v165
        %v236 = vmul.f32 %v166, %v166
        %v237 = vmul.f32 %v167, %v167
        %v238 = vadd.f32 %v206, %v207
        %v239 = vadd.f32 %v238, %v208
        %v240 = vadd.f32 %v239, %v209
        %v241 = vadd.f32 %v240, %v210
        %v242 = vadd.f32 %v241, %v211
        %v243 = vadd.f32 %v242, %v212
        %v244 = vadd.f32 %v243, %v213
        %v245 = vadd.f32 %v244, %v214
        %v246 = vadd.f32 %v245, %v215
        %v247 = vadd.f32 %v246, %v216
        %v248 = vadd.f32 %v247, %v217
        %v249 = vadd.f32 %v248, %v218
        %v250 = vadd.f32 %v249, %v219
        %v251 = vadd.f32 %v250, %v220
        %v252 = vadd.f32 %v251, %v221
        %v253 = vadd.f32 %v252, %v222
        %v254 = vadd.f32 %v253, %v223
        %v255 = vadd.f32 %v254, %v224
        %v256 = vadd.f32 %v255, %v225
        %v257 = vadd.f32 %v256, %v226
        %v258 = vadd.f32 %v257, %v227
        %v259 = vadd.f32 %v258, %v228
        %v260 = vadd.f32 %v259, %v229
        %v261 = vadd.f32 %v260, %v230
        %v262 = vadd.f32 %v261, %v231
        %v263 = vadd.f32 %v262, %v232
        %v264 = vadd.f32 %v263, %v233
        %v265 = vadd.f32 %v264, %v234
        %v266 = vadd.f32 %v265, %v235
        %v267 = vadd.f32 %v266, %v236
        %v268 = vadd.f32 %v267, %v237
        %v269 = vrot.slane %v268, 4
        %v270 = vadd.f32 %v268, %v269
        %v271 = vrot.slane %v270, 2
        %v272 = vadd.f32 %v270, %v271
        %v273 = vrot.slane %v272, 1
        %v274 = vadd.f32 %v272, %v273
        %275 = vst [vmem:[%s134 + $0x1] sm:$0x1] %v274
        %s276 = sand.u32 %s52, 1
        %s277 = scalar_lea.sflag [#allocation4], %s276
        %s278 = sand.u32 %s52, 1
        %s279 = smul.addr %s278, 2
        %s280 = scalar_lea.vmem [#allocation5], %s279
        // Predicated region
        $region29: #{tpu_custom_call.1} parent=23 // pred_check
          %p281 = pneg %p62
        $region30: #{tpu_custom_call.1} parent=23 // pred_check_branch
          %283 = sbr.rel (%p281) target = $region32
        $region31: #{tpu_custom_call.1} parent=23 // pred_region
          %s285 = ssub.s32 32, 32
          %286 = vsyncadd %s277, %s285
          %s287 = smul.addr %s18, 32
          %s288 = scalar_lea.hbm %s1, %s287
          %s290 = sshll.u32 %s280, 4
          %s291 = int_to_ptr.vmem [resolvable:$true] %s290
          %293 = dma.vmem_to_hbm [thread:$0]  %s291, 32, %s288, %s277
        $region32: #{tpu_custom_call.1} parent=23 // pred_fallthru
          _
      $region24: #{tpu_custom_call.1} parent=5 // pred_fallthru
        _
      %p294 = scmp.le.s32.totalorder 2, %s13
      // Predicated region
      $region33: #{tpu_custom_call.1} parent=5 // pred_check
        %p295 = pneg %p294
      $region34: #{tpu_custom_call.1} parent=5 // pred_check_branch
        %297 = sbr.rel (%p295) target = $region36
      $region35: #{tpu_custom_call.1} parent=5 // pred_region
        %s298 = ssub.s32 %s13, 2
        // Predicated region
        $region37: #{tpu_custom_call.1} parent=35 // pred_check
          %p299 = pneg %p68
        $region38: #{tpu_custom_call.1} parent=35 // pred_check_branch
          %301 = sbr.rel (%p299) target = $region40
        $region39: #{tpu_custom_call.1} parent=35 // pred_region
          %s302 = sand.u32 %s53, 1
          %s303 = scalar_lea.sflag [#allocation4], %s302
          %s304 = sand.u32 %s53, 1
          %s305 = smul.addr %s304, 2
          %s306 = scalar_lea.vmem [#allocation5], %s305
          %307 = dma.done %s303, 32
        $region40: #{tpu_custom_call.1} parent=35 // pred_fallthru
          _
      $region36: #{tpu_custom_call.1} parent=5 // pred_fallthru
        _
    $region6: #{tpu_custom_call.1} parent=1 // loop_footer
      %s17 = sadd.s32 1, %s13
    $region7: #{tpu_custom_call.1} parent=1 // loop_footer_branch
      %12 = sbr.rel target = $region3
    $region8: #{tpu_custom_call.1} parent=1 // loop_exit
      _
    %308 = vsyncpa [#allocation3], 1
    %s309 = scalar_lea.sflag [#allocation3], 1
    %310 = vsyncpa %s309, 1
    %311 = vsyncpa [#allocation4], 1
    %s312 = scalar_lea.sflag [#allocation4], 1
    %313 = vsyncpa %s312, 1

</llo_original>
